<compile_context>
chip_gen: v6e
topology: v6e:2x2x1
jax: 0.10.0
libtpu: 0.0.40
codegen_flags: <defaults>
</compile_context>

<pallas_src>
import functools

import jax
import jax.numpy as jnp
from jax.experimental import pallas as pl
from jax.experimental.pallas import tpu as pltpu

HIDDEN = 256
_LANE = 128


def _round_up(x, m):
    return ((x + m - 1) // m) * m


def _device_kind():
    try:
        return jax.devices()[0].device_kind.lower()
    except Exception:
        return ""


_KIND = _device_kind()
# bf16 VPU/EUP exists on v6e/v7x -> run the ELU/tanh epilogue in bf16 there.
# v5e (and older) has no bf16 VPU/EUP -> keep the epilogue in f32.
_ACT_DTYPE = jnp.bfloat16 if ("v6" in _KIND or "v7" in _KIND) else jnp.float32
# v7x has 2 TensorCores per chip; make sure the "parallel" batch grid has >= 2 steps.
_MIN_GRID_STEPS = 2 if "v7" in _KIND else 1


def _elu(x):
    # ELU with alpha=1.0 (PyTorch default). exp(x)-1 instead of expm1 so the bf16
    # epilogue path lowers to the plain EUP exp; accuracy loss is negligible here.
    return jnp.where(x > 0, x, jnp.exp(x) - 1.0)


def actor_kernel(x_ref, w1_ref, b1_ref, w2_ref, b2_ref, w3_ref, b3_ref, o_ref,
                 *, act_dtype):
    # x arrives f32 with its true state_dim (no lane pad); cast to bf16 for the MXU.
    x = x_ref[...].astype(jnp.bfloat16)
    h = jnp.dot(x, w1_ref[...], preferred_element_type=jnp.float32) + b1_ref[...]
    h = _elu(h.astype(act_dtype)).astype(jnp.bfloat16)
    h = jnp.dot(h, w2_ref[...], preferred_element_type=jnp.float32) + b2_ref[...]
    h = _elu(h.astype(act_dtype)).astype(jnp.bfloat16)
    h = jnp.dot(h, w3_ref[...], preferred_element_type=jnp.float32) + b3_ref[...]
    o_ref[...] = jnp.tanh(h.astype(act_dtype)).astype(o_ref.dtype)


def prepare_params(params):
    """One-time parameter prep, hoisted out of the per-call path.

    Casts weights to bf16, biases to f32 (1, out), and zero-pads the last layer to a
    lane-dense multiple of 128 output columns (unmasked vector stores in the kernel).
    """
    w1, b1, w2, b2, w3, b3 = params
    hidden = w1.shape[1]
    action_dim = w3.shape[1]
    n_pad = _round_up(max(action_dim, _LANE), _LANE)

    w1p = jnp.asarray(w1, jnp.bfloat16)
    w2p = jnp.asarray(w2, jnp.bfloat16)
    w3p = jnp.zeros((hidden, n_pad), jnp.bfloat16).at[:, :action_dim].set(
        jnp.asarray(w3, jnp.bfloat16))
    b1p = jnp.reshape(jnp.asarray(b1, jnp.float32), (1, hidden))
    b2p = jnp.reshape(jnp.asarray(b2, jnp.float32), (1, hidden))
    b3p = jnp.zeros((1, n_pad), jnp.float32).at[:, :action_dim].set(
        jnp.reshape(jnp.asarray(b3, jnp.float32), (1, action_dim)))
    return (w1p, b1p, w2p, b2p, w3p, b3p), action_dim


@functools.partial(jax.jit, static_argnames=("action_dim", "block_b"))
def actor_forward(state, prepped_params, action_dim, block_b=None):
    """Fused Actor MLP. state: (B, state_dim) f32 -> (B, action_dim) f32.

    `prepped_params` must come from prepare_params() (bf16 weights, padded last layer).
    """
    w1p, b1p, w2p, b2p, w3p, b3p = prepped_params
    B, state_dim = state.shape
    n_pad = w3p.shape[1]

    # Batch tile: as large as practical (amortizes ~0.35 us/grid-step overhead), rounded
    # to 16 rows; on v7x shrink so the parallel grid has >= 2 steps (one per TensorCore).
    if block_b is None:
        block_b = min(1024, _round_up(B, 16))
        if _MIN_GRID_STEPS > 1 and B >= 32:
            block_b = min(block_b, _round_up(pl.cdiv(B, _MIN_GRID_STEPS), 16))
    b_pad = _round_up(B, block_b)
    grid = (b_pad // block_b,)

    # Only per-call prep: pad the batch dim if it doesn't divide the tile.
    x = state
    if b_pad != B:
        x = jnp.zeros((b_pad, state_dim), state.dtype).at[:B, :].set(state)

    def rep2(shape):
        # Replicated (full) parameter block; constant block index -> stays resident,
        # not re-DMA'd per grid step.
        return pl.BlockSpec(shape, lambda i: (0, 0))

    out = pl.pallas_call(
        functools.partial(actor_kernel, act_dtype=_ACT_DTYPE),
        out_shape=jax.ShapeDtypeStruct((b_pad, n_pad), jnp.bfloat16),
        grid_spec=pl.GridSpec(
            grid=grid,
            in_specs=[
                pl.BlockSpec((block_b, state_dim), lambda i: (i, 0)),
                rep2(w1p.shape),
                rep2(b1p.shape),
                rep2(w2p.shape),
                rep2(b2p.shape),
                rep2(w3p.shape),
                rep2(b3p.shape),
            ],
            out_specs=pl.BlockSpec((block_b, n_pad), lambda i: (i, 0)),
        ),
        compiler_params=pltpu.CompilerParams(
            dimension_semantics=("parallel",),
        ),
    )(x, w1p, b1p, w2p, b2p, w3p, b3p)

    return out[:B, :action_dim].astype(jnp.float32)


def init_actor_params(key, state_dim, action_dim):
    """Deterministic synthetic parameters. Weights stored (in, out); biases (1, out)."""
    k1, k2, k3, k4, k5, k6 = jax.random.split(key, 6)
    scale1 = 1.0 / jnp.sqrt(state_dim)
    scale2 = 1.0 / jnp.sqrt(HIDDEN)
    w1 = jax.random.uniform(k1, (state_dim, HIDDEN), jnp.float32, -scale1, scale1)
    b1 = jax.random.uniform(k2, (1, HIDDEN), jnp.float32, -scale1, scale1)
    w2 = jax.random.uniform(k3, (HIDDEN, HIDDEN), jnp.float32, -scale2, scale2)
    b2 = jax.random.uniform(k4, (1, HIDDEN), jnp.float32, -scale2, scale2)
    w3 = jax.random.uniform(k5, (HIDDEN, action_dim), jnp.float32, -scale2, scale2)
    b3 = jax.random.uniform(k6, (1, action_dim), jnp.float32, -scale2, scale2)
    return (w1, b1, w2, b2, w3, b3)


def actor_reference(state, params):
    """Pure-JAX f32 reference for correctness check."""
    w1, b1, w2, b2, w3, b3 = params

    def elu(x):
        return jnp.where(x > 0, x, jnp.expm1(x))

    h = elu(state @ w1 + b1)
    h = elu(h @ w2 + b2)
    return jnp.tanh(h @ w3 + b3)


if __name__ == "__main__":
    key = jax.random.PRNGKey(0)
    k_param, k_state, k_state2 = jax.random.split(key, 3)

    state_dim = 32   # small synthetic state dim
    action_dim = 8   # small synthetic action dim
    raw_params = init_actor_params(k_param, state_dim, action_dim)
    prepped, action_dim = prepare_params(raw_params)   # one-time prep (hoisted)

    # Small smoke test (single tiny tile, exercises batch padding).
    state = jax.random.normal(k_state, (8, state_dim), jnp.float32)
    out = jax.block_until_ready(actor_forward(state, prepped, action_dim))
    ref = actor_reference(state, raw_params)
    assert out.shape == (8, action_dim)
    assert jnp.allclose(out, ref, atol=3e-2), "mismatch vs reference (small batch)"

    # Larger batch: exercises the big batch tile (and a 2-step parallel grid on v7x).
    state_big = jax.random.normal(k_state2, (512, state_dim), jnp.float32)
    out_big = jax.block_until_ready(actor_forward(state_big, prepped, action_dim))
    ref_big = actor_reference(state_big, raw_params)
    assert out_big.shape == (512, action_dim)
    assert jnp.allclose(out_big, ref_big, atol=3e-2), "mismatch vs reference (large batch)"

    print("KERNEL_OK")
</pallas_src>

<mosaic_0001>
module attributes {stable_mosaic.version = 11 : i64} {
  func.func @actor_kernel(%arg0: i32, %arg1: memref<16x32xf32, #tpu.memory_space<vmem>>, %arg2: memref<32x256xbf16, #tpu.memory_space<vmem>>, %arg3: memref<1x256xf32, #tpu.memory_space<vmem>>, %arg4: memref<256x256xbf16, #tpu.memory_space<vmem>>, %arg5: memref<1x256xf32, #tpu.memory_space<vmem>>, %arg6: memref<256x128xbf16, #tpu.memory_space<vmem>>, %arg7: memref<1x128xf32, #tpu.memory_space<vmem>>, %arg8: memref<16x128xbf16, #tpu.memory_space<vmem>>) attributes {dimension_semantics = [#tpu.dimension_semantics<parallel>], iteration_bounds = array<i64: 1>, scalar_prefetch = 0 : i64, scratch_operands = 0 : i64, tpu.core_type = #tpu.core_type<tc>, window_params = [{transform_indices = @transform_0, window_bounds = array<i64: 16, 32>}, {pipeline_mode = #tpu.pipeline_mode<synchronous>, transform_indices = @transform_1, window_bounds = array<i64: 32, 256>}, {pipeline_mode = #tpu.pipeline_mode<synchronous>, transform_indices = @transform_2, window_bounds = array<i64: 1, 256>}, {pipeline_mode = #tpu.pipeline_mode<synchronous>, transform_indices = @transform_3, window_bounds = array<i64: 256, 256>}, {pipeline_mode = #tpu.pipeline_mode<synchronous>, transform_indices = @transform_4, window_bounds = array<i64: 1, 256>}, {pipeline_mode = #tpu.pipeline_mode<synchronous>, transform_indices = @transform_5, window_bounds = array<i64: 256, 128>}, {pipeline_mode = #tpu.pipeline_mode<synchronous>, transform_indices = @transform_6, window_bounds = array<i64: 1, 128>}, {transform_indices = @transform_7, window_bounds = array<i64: 16, 128>}]} {
    %c0 = arith.constant 0 : index
    %c0_0 = arith.constant 0 : index
    %0 = vector.load %arg1[%c0, %c0_0] : memref<16x32xf32, #tpu.memory_space<vmem>>, vector<16x32xf32>
    %1 = arith.truncf %0 : vector<16x32xf32> to vector<16x32xbf16>
    %c0_1 = arith.constant 0 : index
    %c0_2 = arith.constant 0 : index
    %2 = vector.load %arg2[%c0_1, %c0_2] : memref<32x256xbf16, #tpu.memory_space<vmem>>, vector<32x256xbf16>
    %cst = arith.constant dense<0.000000e+00> : vector<16x256xf32>
    %3 = tpu.matmul %1, %2, %cst {dimension_numbers = #tpu.dot_dimension_numbers<[1], [0], [0], [1], [0, 0, 1, 1], [], []>} : vector<16x32xbf16>, vector<32x256xbf16>, vector<16x256xf32> -> vector<16x256xf32>
    %c0_3 = arith.constant 0 : index
    %c0_4 = arith.constant 0 : index
    %4 = vector.load %arg3[%c0_3, %c0_4] : memref<1x256xf32, #tpu.memory_space<vmem>>, vector<1x256xf32>
    %5 = vector.broadcast %4 : vector<1x256xf32> to vector<16x256xf32>
    %6 = arith.addf %3, %5 : vector<16x256xf32>
    %cst_5 = arith.constant 0.000000e+00 : f32
    %7 = vector.broadcast %cst_5 : f32 to vector<16x256xf32>
    %8 = arith.cmpf ogt, %6, %7 : vector<16x256xf32>
    %9 = math.exp %6 : vector<16x256xf32>
    %cst_6 = arith.constant 1.000000e+00 : f32
    %10 = vector.broadcast %cst_6 : f32 to vector<16x256xf32>
    %11 = arith.subf %9, %10 : vector<16x256xf32>
    %12 = arith.select %8, %6, %11 : vector<16x256xi1>, vector<16x256xf32>
    %13 = arith.truncf %12 : vector<16x256xf32> to vector<16x256xbf16>
    %c0_7 = arith.constant 0 : index
    %c0_8 = arith.constant 0 : index
    %14 = vector.load %arg4[%c0_7, %c0_8] : memref<256x256xbf16, #tpu.memory_space<vmem>>, vector<256x256xbf16>
    %cst_9 = arith.constant dense<0.000000e+00> : vector<16x256xf32>
    %15 = tpu.matmul %13, %14, %cst_9 {dimension_numbers = #tpu.dot_dimension_numbers<[1], [0], [0], [1], [0, 0, 1, 1], [], []>} : vector<16x256xbf16>, vector<256x256xbf16>, vector<16x256xf32> -> vector<16x256xf32>
    %c0_10 = arith.constant 0 : index
    %c0_11 = arith.constant 0 : index
    %16 = vector.load %arg5[%c0_10, %c0_11] : memref<1x256xf32, #tpu.memory_space<vmem>>, vector<1x256xf32>
    %17 = vector.broadcast %16 : vector<1x256xf32> to vector<16x256xf32>
    %18 = arith.addf %15, %17 : vector<16x256xf32>
    %cst_12 = arith.constant 0.000000e+00 : f32
    %19 = vector.broadcast %cst_12 : f32 to vector<16x256xf32>
    %20 = arith.cmpf ogt, %18, %19 : vector<16x256xf32>
    %21 = math.exp %18 : vector<16x256xf32>
    %cst_13 = arith.constant 1.000000e+00 : f32
    %22 = vector.broadcast %cst_13 : f32 to vector<16x256xf32>
    %23 = arith.subf %21, %22 : vector<16x256xf32>
    %24 = arith.select %20, %18, %23 : vector<16x256xi1>, vector<16x256xf32>
    %25 = arith.truncf %24 : vector<16x256xf32> to vector<16x256xbf16>
    %c0_14 = arith.constant 0 : index
    %c0_15 = arith.constant 0 : index
    %26 = vector.load %arg6[%c0_14, %c0_15] : memref<256x128xbf16, #tpu.memory_space<vmem>>, vector<256x128xbf16>
    %cst_16 = arith.constant dense<0.000000e+00> : vector<16x128xf32>
    %27 = tpu.matmul %25, %26, %cst_16 {dimension_numbers = #tpu.dot_dimension_numbers<[1], [0], [0], [1], [0, 0, 1, 1], [], []>} : vector<16x256xbf16>, vector<256x128xbf16>, vector<16x128xf32> -> vector<16x128xf32>
    %c0_17 = arith.constant 0 : index
    %c0_18 = arith.constant 0 : index
    %28 = vector.load %arg7[%c0_17, %c0_18] : memref<1x128xf32, #tpu.memory_space<vmem>>, vector<1x128xf32>
    %29 = vector.broadcast %28 : vector<1x128xf32> to vector<16x128xf32>
    %30 = arith.addf %27, %29 : vector<16x128xf32>
    %31 = math.tanh %30 : vector<16x128xf32>
    %32 = arith.truncf %31 : vector<16x128xf32> to vector<16x128xbf16>
    %c0_19 = arith.constant 0 : index
    %c0_20 = arith.constant 0 : index
    %33 = vector.load %arg8[%c0_19, %c0_20] : memref<16x128xbf16, #tpu.memory_space<vmem>>, vector<16x128xbf16>
    tpu.vector_store %arg8[%c0_19, %c0_20], %32 {strides = array<i32>} : memref<16x128xbf16, #tpu.memory_space<vmem>>, vector<16x128xbf16>,
    return
  }
  func.func @transform_0(%arg0: i32) -> (i32, i32) {
    %c0_i32 = arith.constant 0 : i32
    %c0_i32_0 = arith.constant 0 : i32
    return %arg0, %c0_i32 : i32, i32
  }
  func.func @transform_1(%arg0: i32) -> (i32, i32) {
    %c0_i32 = arith.constant 0 : i32
    %c0_i32_0 = arith.constant 0 : i32
    %c0_i32_1 = arith.constant 0 : i32
    return %c0_i32, %c0_i32_0 : i32, i32
  }
  func.func @transform_2(%arg0: i32) -> (i32, i32) {
    %c0_i32 = arith.constant 0 : i32
    %c0_i32_0 = arith.constant 0 : i32
    %c0_i32_1 = arith.constant 0 : i32
    return %c0_i32, %c0_i32_0 : i32, i32
  }
  func.func @transform_3(%arg0: i32) -> (i32, i32) {
    %c0_i32 = arith.constant 0 : i32
    %c0_i32_0 = arith.constant 0 : i32
    %c0_i32_1 = arith.constant 0 : i32
    return %c0_i32, %c0_i32_0 : i32, i32
  }
  func.func @transform_4(%arg0: i32) -> (i32, i32) {
    %c0_i32 = arith.constant 0 : i32
    %c0_i32_0 = arith.constant 0 : i32
    %c0_i32_1 = arith.constant 0 : i32
    return %c0_i32, %c0_i32_0 : i32, i32
  }
  func.func @transform_5(%arg0: i32) -> (i32, i32) {
    %c0_i32 = arith.constant 0 : i32
    %c0_i32_0 = arith.constant 0 : i32
    %c0_i32_1 = arith.constant 0 : i32
    return %c0_i32, %c0_i32_0 : i32, i32
  }
  func.func @transform_6(%arg0: i32) -> (i32, i32) {
    %c0_i32 = arith.constant 0 : i32
    %c0_i32_0 = arith.constant 0 : i32
    %c0_i32_1 = arith.constant 0 : i32
    return %c0_i32, %c0_i32_0 : i32, i32
  }
  func.func @transform_7(%arg0: i32) -> (i32, i32) {
    %c0_i32 = arith.constant 0 : i32
    %c0_i32_0 = arith.constant 0 : i32
    return %arg0, %c0_i32 : i32, i32
  }
}

</mosaic_0001>

<llo_original>
// kernel: actor_forward.1
$region0: #{actor_forward.1}
  #allocation0 [shape = 'u32[]', space=smem, size = 0x4, offset = 0x4, fixed_abs, tag = 'smem constant byte address 0x4 - core index']
  #allocation1 [shape = 'u32[144,128]{1,0:T(1,128)}', space=vmem, size = 0x12000, scoped, tag = 'internal scratch']
  %s0 = inlined_call_operand.vmem [shape: f32[16,32], index: 0, kind: input, shape index: {}]
  %s1 = inlined_call_operand.hbm [shape: bf16[32,256], index: 1, kind: input, shape index: {}]
  %s2 = inlined_call_operand.vmem [shape: f32[1,256], index: 2, kind: input, shape index: {}]
  %s3 = inlined_call_operand.hbm [shape: bf16[256,256], index: 3, kind: input, shape index: {}]
  %s4 = inlined_call_operand.vmem [shape: f32[1,256], index: 4, kind: input, shape index: {}]
  %s5 = inlined_call_operand.hbm [shape: bf16[256,128], index: 5, kind: input, shape index: {}]
  %s6 = inlined_call_operand.vmem [shape: f32[1,128], index: 6, kind: input, shape index: {}]
  %s7 = inlined_call_operand.vmem [shape: bf16[16,128], index: 7, kind: output, shape index: {}]
  %s8 = sld [smem:[#allocation0]]
  $region50: #{actor_forward.1} parent=0
    _
  %s10 = ssub.s32 1, %s8
  %s11 = scalar_select 0, %s10, %s8
  $region1: #{actor_forward.1} parent=0
    #allocation2 [shape = 'u8[16384]{0}', space=vmem, size = 0x4000, scoped, tag = 'input window, operand 1, single buffered']
    #allocation3 [shape = 's32[1]{0}', space=sflag, size = 0x4, scoped, tag = 'scoped memory for actor_forward.1']
    #allocation4 [shape = 'u8[131072]{0}', space=vmem, size = 0x20000, scoped, tag = 'input window, operand 3, single buffered']
    #allocation5 [shape = 's32[1]{0}', space=sflag, size = 0x4, scoped, tag = 'scoped memory for actor_forward.1']
    #allocation6 [shape = 'u8[65536]{0}', space=vmem, size = 0x10000, scoped, tag = 'input window, operand 5, single buffered']
    %12 = vsyncpa [#allocation3], 0
    %13 = vsyncpa [#allocation5], 0
    // Predicated region
    $region2: #{actor_forward.1} parent=1 // pred_check
      _
    $region3: #{actor_forward.1} parent=1 // pred_check_branch
      %15 = sbr.rel (0) target = $region5
    $region4: #{actor_forward.1} parent=1 // pred_region
      _
    $region5: #{actor_forward.1} parent=1 // pred_fallthru
      _
    // Predicated region
    $region6: #{actor_forward.1} parent=1 // pred_check
      _
    $region7: #{actor_forward.1} parent=1 // pred_check_branch
      %17 = sbr.rel (0) target = $region9
    $region8: #{actor_forward.1} parent=1 // pred_region
      %s19 = ssub.s32 512, 512
      %20 = vsyncadd [#allocation3], %s19
      %s21 = sshll.u32 [#allocation2], 4
      %s22 = int_to_ptr.vmem [resolvable:$true] %s21
      %27 = dma.hbm_to_vmem [thread:$0]  %s1, 512, %s22, [#allocation3], 128, 128, 8
    $region9: #{actor_forward.1} parent=1 // pred_fallthru
      _
    // Predicated region
    $region10: #{actor_forward.1} parent=1 // pred_check
      _
    $region11: #{actor_forward.1} parent=1 // pred_check_branch
      %29 = sbr.rel (0) target = $region13
    $region12: #{actor_forward.1} parent=1 // pred_region
      _
    $region13: #{actor_forward.1} parent=1 // pred_fallthru
      _
    // Predicated region
    $region14: #{actor_forward.1} parent=1 // pred_check
      _
    $region15: #{actor_forward.1} parent=1 // pred_check_branch
      %31 = sbr.rel (0) target = $region17
    $region16: #{actor_forward.1} parent=1 // pred_region
      %s33 = ssub.s32 4096, 4096
      %34 = vsyncadd [#allocation5], %s33
      %s35 = sshll.u32 [#allocation4], 4
      %s36 = int_to_ptr.vmem [resolvable:$true] %s35
      %41 = dma.hbm_to_vmem [thread:$0]  %s3, 4096, %s36, [#allocation5], 128, 128, 8
    $region17: #{actor_forward.1} parent=1 // pred_fallthru
      _
    // Predicated region
    $region18: #{actor_forward.1} parent=1 // pred_check
      _
    $region19: #{actor_forward.1} parent=1 // pred_check_branch
      %43 = sbr.rel (0) target = $region21
    $region20: #{actor_forward.1} parent=1 // pred_region
      _
    $region21: #{actor_forward.1} parent=1 // pred_fallthru
      _
    // Predicated region
    $region22: #{actor_forward.1} parent=1 // pred_check
      _
    $region23: #{actor_forward.1} parent=1 // pred_check_branch
      %45 = sbr.rel (0) target = $region25
    $region24: #{actor_forward.1} parent=1 // pred_region
      %s47 = ssub.s32 2048, 2048
      %48 = vsyncadd [#allocation5], %s47
      %s49 = sshll.u32 [#allocation6], 4
      %s50 = int_to_ptr.vmem [resolvable:$true] %s49
      %55 = dma.hbm_to_vmem [thread:$0]  %s5, 2048, %s50, [#allocation5], 64, 64, 4
    $region25: #{actor_forward.1} parent=1 // pred_fallthru
      _
    // Predicated region
    $region26: #{actor_forward.1} parent=1 // pred_check
      _
    $region27: #{actor_forward.1} parent=1 // pred_check_branch
      %57 = sbr.rel (0) target = $region29
    $region28: #{actor_forward.1} parent=1 // pred_region
      _
    $region29: #{actor_forward.1} parent=1 // pred_fallthru
      _
    // Predicated region
    $region30: #{actor_forward.1} parent=1 // pred_check
      _
    $region31: #{actor_forward.1} parent=1 // pred_check_branch
      %59 = sbr.rel (0) target = $region33
    $region32: #{actor_forward.1} parent=1 // pred_region
      %60 = dma.done [#allocation3], 512
    $region33: #{actor_forward.1} parent=1 // pred_fallthru
      _
    // Predicated region
    $region34: #{actor_forward.1} parent=1 // pred_check
      _
    $region35: #{actor_forward.1} parent=1 // pred_check_branch
      %62 = sbr.rel (0) target = $region37
    $region36: #{actor_forward.1} parent=1 // pred_region
      %63 = dma.done [#allocation5], 4096
    $region37: #{actor_forward.1} parent=1 // pred_fallthru
      _
    // Predicated region
    $region38: #{actor_forward.1} parent=1 // pred_check
      _
    $region39: #{actor_forward.1} parent=1 // pred_check_branch
      %65 = sbr.rel (0) target = $region41
    $region40: #{actor_forward.1} parent=1 // pred_region
      %66 = dma.done [#allocation5], 2048
    $region41: #{actor_forward.1} parent=1 // pred_fallthru
      _
    %v68 = vld [vmem:[%s0] sm:$0xff]
    %v69 = vld [vmem:[%s0 + $0x8] sm:$0xff]
    %v70 = vpack.c.bf16 %v69, %v68
    %v71 = vld [vmem:[#allocation2] sm:$0xff]
    %v72 = vld [vmem:[#allocation2 + $0x8] sm:$0xff]
    %v73 = vld [vmem:[#allocation2 + $0x10] sm:$0xff]
    %v74 = vld [vmem:[#allocation2 + $0x18] sm:$0xff]
    %v75 = vld [vmem:[%s2] sm:$0x3]
    %v77 = vlaneseq
    %v78 = vshrl.u32 %v77, 7
    %v79 = vsub.s32 0, %v78
    %v80 = vrot.slane %v75, %v79
    %v81 = vlaneseq
    %v82 = vshrl.u32 %v81, 7
    %v83 = vsub.s32 1, %v82
    %v84 = vrot.slane %v75, %v83
    %v91 = vunpack.c.l.b16 %v71
    %v92 = vunpack.c.h.b16 %v71
    %v93 = vunpack.c.l.b16 %v72
    %v94 = vunpack.c.h.b16 %v72
    %v95 = vunpack.c.l.b16 %v73
    %v96 = vunpack.c.h.b16 %v73
    %v97 = vunpack.c.l.b16 %v74
    %v98 = vunpack.c.h.b16 %v74
    %v99 = vpack.c.b16 %v93, %v91
    %v100 = vpack.c.b16 %v94, %v92
    %v101 = vpack.c.b16 %v97, %v95
    %v102 = vpack.c.b16 %v98, %v96
    %vm107 = vcmask 261120
    %v109 = vsel %vm107, %v70, 0
    %111 = vmatprep.subr.bf16.mxu0 0
    %112 = vmatpush1.bf16.msra.mxu0 0
    %113 = vmatprep.subr.bf16.mxu0 0
    %114 = vmatpush1.bf16.msra.mxu0 0
    %115 = vmatprep.subr.bf16.mxu0 0
    %116 = vmatpush1.bf16.msra.mxu0 0
    %117 = vmatprep.subr.bf16.mxu0 0
    %118 = vmatpush1.bf16.msra.mxu0 0
    %119 = vmatprep.subr.bf16.mxu0 0
    %120 = vmatpush1.bf16.msra.mxu0 0
    %121 = vmatprep.subr.bf16.mxu0 0
    %122 = vmatpush1.bf16.msra.mxu0 0
    %123 = vmatprep.subr.bf16.mxu0 %v102
    %124 = vmatpush1.bf16.msra.mxu0 %v101
    %125 = vmatprep.subr.bf16.mxu0 %v100
    %126 = vmatpush1.bf16.msra.mxu0 %v99
    %127 = vmatprep.subr.bf16.mxu0 0
    %128 = vmatpush2.bf16.msra.mxu0 0
    %129 = vmatprep.subr.bf16.mxu0 0
    %130 = vmatpush2.bf16.msra.mxu0 0
    %131 = vmatprep.subr.bf16.mxu0 0
    %132 = vmatpush2.bf16.msra.mxu0 0
    %133 = vmatprep.subr.bf16.mxu0 0
    %134 = vmatpush2.bf16.msra.mxu0 0
    %135 = vmatprep.subr.bf16.mxu0 0
    %136 = vmatpush2.bf16.msra.mxu0 0
    %137 = vmatprep.subr.bf16.mxu0 0
    %138 = vmatpush2.bf16.msra.mxu0 0
    %139 = vmatprep.subr.bf16.mxu0 0
    %140 = vmatpush2.bf16.msra.mxu0 0
    %141 = vmatprep.subr.bf16.mxu0 0
    %142 = vmatpush2.bf16.msra.mxu0 0
    %143 = vmatprep.mubr.bf16.mxu0 0
    %144 = vmatmul.mubr.bf16.gmra.mxu0 %v109
    %v145 = vpop.f32.mrf.mxu0
    %v146 = vadd.f32 %v80, %v145
    %v147 = vpop.f32.mrf.mxu0
    %v148 = vadd.f32 %v84, %v147
    %v149 = vpop.f32.mrf.mxu0
    %v150 = vadd.f32 %v80, %v149
    %v151 = vpop.f32.mrf.mxu0
    %v152 = vadd.f32 %v84, %v151
    %153 = vdwg.mxu0
    %vm154 = vcmp.gt.f32.partialorder %v146, 0.0
    %vm155 = vcmp.gt.f32.partialorder %v148, 0.0
    %vm156 = vcmp.gt.f32.partialorder %v150, 0.0
    %vm157 = vcmp.gt.f32.partialorder %v152, 0.0
    %v158 = vmul.f32 %v146, 1.442695
    %v159 = vpow.pop %v158
    %v160 = vmul.f32 %v148, 1.442695
    %v161 = vpow.pop %v160
    %v162 = vmul.f32 %v150, 1.442695
    %v163 = vpow.pop %v162
    %v164 = vmul.f32 %v152, 1.442695
    %v165 = vpow.pop %v164
    %v166 = vsub.f32 %v159, 1.0
    %v167 = vsub.f32 %v161, 1.0
    %v168 = vsub.f32 %v163, 1.0
    %v169 = vsub.f32 %v165, 1.0
    %v170 = vsel %vm154, %v146, %v166
    %v171 = vsel %vm155, %v148, %v167
    %v172 = vsel %vm156, %v150, %v168
    %v173 = vsel %vm157, %v152, %v169
    %v174 = vpack.c.bf16 %v172, %v170
    %v175 = vpack.c.bf16 %v173, %v171
    %v176 = vld [vmem:[#allocation4] sm:$0xff]
    %v177 = vld [vmem:[#allocation4 + $0x8] sm:$0xff]
    %v178 = vld [vmem:[#allocation4 + $0x10] sm:$0xff]
    %v179 = vld [vmem:[#allocation4 + $0x18] sm:$0xff]
    %v180 = vld [vmem:[#allocation4 + $0x20] sm:$0xff]
    %v181 = vld [vmem:[#allocation4 + $0x28] sm:$0xff]
    %v182 = vld [vmem:[#allocation4 + $0x30] sm:$0xff]
    %v183 = vld [vmem:[#allocation4 + $0x38] sm:$0xff]
    %v184 = vld [vmem:[#allocation4 + $0x40] sm:$0xff]
    %v185 = vld [vmem:[#allocation4 + $0x48] sm:$0xff]
    %v186 = vld [vmem:[#allocation4 + $0x50] sm:$0xff]
    %v187 = vld [vmem:[#allocation4 + $0x58] sm:$0xff]
    %v188 = vld [vmem:[#allocation4 + $0x60] sm:$0xff]
    %v189 = vld [vmem:[#allocation4 + $0x68] sm:$0xff]
    %v190 = vld [vmem:[#allocation4 + $0x70] sm:$0xff]
    %v191 = vld [vmem:[#allocation4 + $0x78] sm:$0xff]
    %v192 = vld [vmem:[#allocation4 + $0x80] sm:$0xff]
    %v193 = vld [vmem:[#allocation4 + $0x88] sm:$0xff]
    %v194 = vld [vmem:[#allocation4 + $0x90] sm:$0xff]
    %v195 = vld [vmem:[#allocation4 + $0x98] sm:$0xff]
    %v196 = vld [vmem:[#allocation4 + $0xa0] sm:$0xff]
    %v197 = vld [vmem:[#allocation4 + $0xa8] sm:$0xff]
    %v198 = vld [vmem:[#allocation4 + $0xb0] sm:$0xff]
    %v199 = vld [vmem:[#allocation4 + $0xb8] sm:$0xff]
    %v200 = vld [vmem:[#allocation4 + $0xc0] sm:$0xff]
    %v201 = vld [vmem:[#allocation4 + $0xc8] sm:$0xff]
    %v202 = vld [vmem:[#allocation4 + $0xd0] sm:$0xff]
    %v203 = vld [vmem:[#allocation4 + $0xd8] sm:$0xff]
    %v204 = vld [vmem:[#allocation4 + $0xe0] sm:$0xff]
    %v205 = vld [vmem:[#allocation4 + $0xe8] sm:$0xff]
    %v206 = vld [vmem:[#allocation4 + $0xf0] sm:$0xff]
    %v207 = vld [vmem:[#allocation4 + $0xf8] sm:$0xff]
    %v208 = vld [vmem:[%s4] sm:$0x3]
    %v210 = vlaneseq
    %v211 = vshrl.u32 %v210, 7
    %v212 = vsub.s32 0, %v211
    %v213 = vrot.slane %v208, %v212
    %v214 = vlaneseq
    %v215 = vshrl.u32 %v214, 7
    %v216 = vsub.s32 1, %v215
    %v217 = vrot.slane %v208, %v216
    %v252 = vunpack.c.l.b16 %v176
    %v253 = vunpack.c.h.b16 %v176
    %v254 = vunpack.c.l.b16 %v177
    %v255 = vunpack.c.h.b16 %v177
    %v256 = vunpack.c.l.b16 %v178
    %v257 = vunpack.c.h.b16 %v178
    %v258 = vunpack.c.l.b16 %v179
    %v259 = vunpack.c.h.b16 %v179
    %v260 = vunpack.c.l.b16 %v180
    %v261 = vunpack.c.h.b16 %v180
    %v262 = vunpack.c.l.b16 %v181
    %v263 = vunpack.c.h.b16 %v181
    %v264 = vunpack.c.l.b16 %v182
    %v265 = vunpack.c.h.b16 %v182
    %v266 = vunpack.c.l.b16 %v183
    %v267 = vunpack.c.h.b16 %v183
    %v268 = vunpack.c.l.b16 %v184
    %v269 = vunpack.c.h.b16 %v184
    %v270 = vunpack.c.l.b16 %v185
    %v271 = vunpack.c.h.b16 %v185
    %v272 = vunpack.c.l.b16 %v186
    %v273 = vunpack.c.h.b16 %v186
    %v274 = vunpack.c.l.b16 %v187
    %v275 = vunpack.c.h.b16 %v187
    %v276 = vunpack.c.l.b16 %v188
    %v277 = vunpack.c.h.b16 %v188
    %v278 = vunpack.c.l.b16 %v189
    %v279 = vunpack.c.h.b16 %v189
    %v280 = vunpack.c.l.b16 %v190
    %v281 = vunpack.c.h.b16 %v190
    %v282 = vunpack.c.l.b16 %v191
    %v283 = vunpack.c.h.b16 %v191
    %v284 = vunpack.c.l.b16 %v192
    %v285 = vunpack.c.h.b16 %v192
    %v286 = vunpack.c.l.b16 %v193
    %v287 = vunpack.c.h.b16 %v193
    %v288 = vunpack.c.l.b16 %v194
    %v289 = vunpack.c.h.b16 %v194
    %v290 = vunpack.c.l.b16 %v195
    %v291 = vunpack.c.h.b16 %v195
    %v292 = vunpack.c.l.b16 %v196
    %v293 = vunpack.c.h.b16 %v196
    %v294 = vunpack.c.l.b16 %v197
    %v295 = vunpack.c.h.b16 %v197
    %v296 = vunpack.c.l.b16 %v198
    %v297 = vunpack.c.h.b16 %v198
    %v298 = vunpack.c.l.b16 %v199
    %v299 = vunpack.c.h.b16 %v199
    %v300 = vunpack.c.l.b16 %v200
    %v301 = vunpack.c.h.b16 %v200
    %v302 = vunpack.c.l.b16 %v201
    %v303 = vunpack.c.h.b16 %v201
    %v304 = vunpack.c.l.b16 %v202
    %v305 = vunpack.c.h.b16 %v202
    %v306 = vunpack.c.l.b16 %v203
    %v307 = vunpack.c.h.b16 %v203
    %v308 = vunpack.c.l.b16 %v204
    %v309 = vunpack.c.h.b16 %v204
    %v310 = vunpack.c.l.b16 %v205
    %v311 = vunpack.c.h.b16 %v205
    %v312 = vunpack.c.l.b16 %v206
    %v313 = vunpack.c.h.b16 %v206
    %v314 = vunpack.c.l.b16 %v207
    %v315 = vunpack.c.h.b16 %v207
    %v316 = vpack.c.b16 %v254, %v252
    %v317 = vpack.c.b16 %v255, %v253
    %v318 = vpack.c.b16 %v258, %v256
    %v319 = vpack.c.b16 %v259, %v257
    %v320 = vpack.c.b16 %v262, %v260
    %v321 = vpack.c.b16 %v263, %v261
    %v322 = vpack.c.b16 %v266, %v264
    %v323 = vpack.c.b16 %v267, %v265
    %v324 = vpack.c.b16 %v270, %v268
    %v325 = vpack.c.b16 %v271, %v269
    %v326 = vpack.c.b16 %v274, %v272
    %v327 = vpack.c.b16 %v275, %v273
    %v328 = vpack.c.b16 %v278, %v276
    %v329 = vpack.c.b16 %v279, %v277
    %v330 = vpack.c.b16 %v282, %v280
    %v331 = vpack.c.b16 %v283, %v281
    %v332 = vpack.c.b16 %v286, %v284
    %v333 = vpack.c.b16 %v287, %v285
    %v334 = vpack.c.b16 %v290, %v288
    %v335 = vpack.c.b16 %v291, %v289
    %v336 = vpack.c.b16 %v294, %v292
    %v337 = vpack.c.b16 %v295, %v293
    %v338 = vpack.c.b16 %v298, %v296
    %v339 = vpack.c.b16 %v299, %v297
    %v340 = vpack.c.b16 %v302, %v300
    %v341 = vpack.c.b16 %v303, %v301
    %v342 = vpack.c.b16 %v306, %v304
    %v343 = vpack.c.b16 %v307, %v305
    %v344 = vpack.c.b16 %v310, %v308
    %v345 = vpack.c.b16 %v311, %v309
    %v346 = vpack.c.b16 %v314, %v312
    %v347 = vpack.c.b16 %v315, %v313
    %380 = vmatprep.subr.bf16.mxu0 %v331
    %381 = vmatpush1.bf16.msra.mxu0 %v330
    %382 = vmatprep.subr.bf16.mxu0 %v329
    %383 = vmatpush1.bf16.msra.mxu0 %v328
    %384 = vmatprep.subr.bf16.mxu0 %v327
    %385 = vmatpush1.bf16.msra.mxu0 %v326
    %386 = vmatprep.subr.bf16.mxu0 %v325
    %387 = vmatpush1.bf16.msra.mxu0 %v324
    %388 = vmatprep.subr.bf16.mxu0 %v323
    %389 = vmatpush1.bf16.msra.mxu0 %v322
    %390 = vmatprep.subr.bf16.mxu0 %v321
    %391 = vmatpush1.bf16.msra.mxu0 %v320
    %392 = vmatprep.subr.bf16.mxu0 %v319
    %393 = vmatpush1.bf16.msra.mxu0 %v318
    %394 = vmatprep.subr.bf16.mxu0 %v317
    %395 = vmatpush1.bf16.msra.mxu0 %v316
    %396 = vmatprep.subr.bf16.mxu0 %v347
    %397 = vmatpush2.bf16.msra.mxu0 %v346
    %398 = vmatprep.subr.bf16.mxu0 %v345
    %399 = vmatpush2.bf16.msra.mxu0 %v344
    %400 = vmatprep.subr.bf16.mxu0 %v343
    %401 = vmatpush2.bf16.msra.mxu0 %v342
    %402 = vmatprep.subr.bf16.mxu0 %v341
    %403 = vmatpush2.bf16.msra.mxu0 %v340
    %404 = vmatprep.subr.bf16.mxu0 %v339
    %405 = vmatpush2.bf16.msra.mxu0 %v338
    %406 = vmatprep.subr.bf16.mxu0 %v337
    %407 = vmatpush2.bf16.msra.mxu0 %v336
    %408 = vmatprep.subr.bf16.mxu0 %v335
    %409 = vmatpush2.bf16.msra.mxu0 %v334
    %410 = vmatprep.subr.bf16.mxu0 %v333
    %411 = vmatpush2.bf16.msra.mxu0 %v332
    %412 = vmatprep.mubr.bf16.mxu0 %v175
    %413 = vmatmul.mubr.bf16.gmra.mxu0 %v174
    %v414 = vpop.f32.mrf.mxu0
    %v415 = vadd.f32 %v213, %v414
    %v416 = vpop.f32.mrf.mxu0
    %v417 = vadd.f32 %v217, %v416
    %v418 = vpop.f32.mrf.mxu0
    %v419 = vadd.f32 %v213, %v418
    %v420 = vpop.f32.mrf.mxu0
    %v421 = vadd.f32 %v217, %v420
    %422 = vdwg.mxu0
    %vm423 = vcmp.gt.f32.partialorder %v415, 0.0
    %vm424 = vcmp.gt.f32.partialorder %v417, 0.0
    %vm425 = vcmp.gt.f32.partialorder %v419, 0.0
    %vm426 = vcmp.gt.f32.partialorder %v421, 0.0
    %v427 = vmul.f32 %v415, 1.442695
    %v428 = vpow.pop %v427
    %v429 = vmul.f32 %v417, 1.442695
    %v430 = vpow.pop %v429
    %v431 = vmul.f32 %v419, 1.442695
    %v432 = vpow.pop %v431
    %v433 = vmul.f32 %v421, 1.442695
    %v434 = vpow.pop %v433
    %v435 = vsub.f32 %v428, 1.0
    %v436 = vsub.f32 %v430, 1.0
    %v437 = vsub.f32 %v432, 1.0
    %v438 = vsub.f32 %v434, 1.0
    %v439 = vsel %vm423, %v415, %v435
    %v440 = vsel %vm424, %v417, %v436
    %v441 = vsel %vm425, %v419, %v437
    %v442 = vsel %vm426, %v421, %v438
    %v443 = vpack.c.bf16 %v441, %v439
    %v444 = vpack.c.bf16 %v442, %v440
    %v445 = vld [vmem:[#allocation6] sm:$0xf]
    %v446 = vld [vmem:[#allocation6 + $0x4] sm:$0xf]
    %v447 = vld [vmem:[#allocation6 + $0x8] sm:$0xf]
    %v448 = vld [vmem:[#allocation6 + $0xc] sm:$0xf]
    %v449 = vld [vmem:[#allocation6 + $0x10] sm:$0xf]
    %v450 = vld [vmem:[#allocation6 + $0x14] sm:$0xf]
    %v451 = vld [vmem:[#allocation6 + $0x18] sm:$0xf]
    %v452 = vld [vmem:[#allocation6 + $0x1c] sm:$0xf]
    %v453 = vld [vmem:[#allocation6 + $0x20] sm:$0xf]
    %v454 = vld [vmem:[#allocation6 + $0x24] sm:$0xf]
    %v455 = vld [vmem:[#allocation6 + $0x28] sm:$0xf]
    %v456 = vld [vmem:[#allocation6 + $0x2c] sm:$0xf]
    %v457 = vld [vmem:[#allocation6 + $0x30] sm:$0xf]
    %v458 = vld [vmem:[#allocation6 + $0x34] sm:$0xf]
    %v459 = vld [vmem:[#allocation6 + $0x38] sm:$0xf]
    %v460 = vld [vmem:[#allocation6 + $0x3c] sm:$0xf]
    %v461 = vld [vmem:[#allocation6 + $0x40] sm:$0xf]
    %v462 = vld [vmem:[#allocation6 + $0x44] sm:$0xf]
    %v463 = vld [vmem:[#allocation6 + $0x48] sm:$0xf]
    %v464 = vld [vmem:[#allocation6 + $0x4c] sm:$0xf]
    %v465 = vld [vmem:[#allocation6 + $0x50] sm:$0xf]
    %v466 = vld [vmem:[#allocation6 + $0x54] sm:$0xf]
    %v467 = vld [vmem:[#allocation6 + $0x58] sm:$0xf]
    %v468 = vld [vmem:[#allocation6 + $0x5c] sm:$0xf]
    %v469 = vld [vmem:[#allocation6 + $0x60] sm:$0xf]
    %v470 = vld [vmem:[#allocation6 + $0x64] sm:$0xf]
    %v471 = vld [vmem:[#allocation6 + $0x68] sm:$0xf]
    %v472 = vld [vmem:[#allocation6 + $0x6c] sm:$0xf]
    %v473 = vld [vmem:[#allocation6 + $0x70] sm:$0xf]
    %v474 = vld [vmem:[#allocation6 + $0x74] sm:$0xf]
    %v475 = vld [vmem:[#allocation6 + $0x78] sm:$0xf]
    %v476 = vld [vmem:[#allocation6 + $0x7c] sm:$0xf]
    %v477 = vld [vmem:[%s6] sm:$0x1]
    %v479 = vlaneseq
    %v480 = vshrl.u32 %v479, 7
    %v481 = vsub.s32 0, %v480
    %v482 = vrot.slane %v477, %v481
    %v516 = vunpack.c.l.b16 %v445
    %v517 = vunpack.c.l.b16 %v446
    %v518 = vunpack.c.l.b16 %v447
    %v519 = vunpack.c.l.b16 %v448
    %v520 = vunpack.c.l.b16 %v449
    %v521 = vunpack.c.l.b16 %v450
    %v522 = vunpack.c.l.b16 %v451
    %v523 = vunpack.c.l.b16 %v452
    %v524 = vunpack.c.l.b16 %v453
    %v525 = vunpack.c.l.b16 %v454
    %v526 = vunpack.c.l.b16 %v455
    %v527 = vunpack.c.l.b16 %v456
    %v528 = vunpack.c.l.b16 %v457
    %v529 = vunpack.c.l.b16 %v458
    %v530 = vunpack.c.l.b16 %v459
    %v531 = vunpack.c.l.b16 %v460
    %v532 = vunpack.c.l.b16 %v461
    %v533 = vunpack.c.l.b16 %v462
    %v534 = vunpack.c.l.b16 %v463
    %v535 = vunpack.c.l.b16 %v464
    %v536 = vunpack.c.l.b16 %v465
    %v537 = vunpack.c.l.b16 %v466
    %v538 = vunpack.c.l.b16 %v467
    %v539 = vunpack.c.l.b16 %v468
    %v540 = vunpack.c.l.b16 %v469
    %v541 = vunpack.c.l.b16 %v470
    %v542 = vunpack.c.l.b16 %v471
    %v543 = vunpack.c.l.b16 %v472
    %v544 = vunpack.c.l.b16 %v473
    %v545 = vunpack.c.l.b16 %v474
    %v546 = vunpack.c.l.b16 %v475
    %v547 = vunpack.c.l.b16 %v476
    %v548 = vpack.c.b16 %v517, %v516
    %v549 = vpack.c.b16 %v519, %v518
    %v550 = vpack.c.b16 %v521, %v520
    %v551 = vpack.c.b16 %v523, %v522
    %v552 = vpack.c.b16 %v525, %v524
    %v553 = vpack.c.b16 %v527, %v526
    %v554 = vpack.c.b16 %v529, %v528
    %v555 = vpack.c.b16 %v531, %v530
    %v556 = vpack.c.b16 %v533, %v532
    %v557 = vpack.c.b16 %v535, %v534
    %v558 = vpack.c.b16 %v537, %v536
    %v559 = vpack.c.b16 %v539, %v538
    %v560 = vpack.c.b16 %v541, %v540
    %v561 = vpack.c.b16 %v543, %v542
    %v562 = vpack.c.b16 %v545, %v544
    %v563 = vpack.c.b16 %v547, %v546
    %580 = vmatprep.subr.bf16.mxu0 0
    %581 = vmatpush1.bf16.msra.mxu0 %v555
    %582 = vmatprep.subr.bf16.mxu0 0
    %583 = vmatpush1.bf16.msra.mxu0 %v554
    %584 = vmatprep.subr.bf16.mxu0 0
    %585 = vmatpush1.bf16.msra.mxu0 %v553
    %586 = vmatprep.subr.bf16.mxu0 0
    %587 = vmatpush1.bf16.msra.mxu0 %v552
    %588 = vmatprep.subr.bf16.mxu0 0
    %589 = vmatpush1.bf16.msra.mxu0 %v551
    %590 = vmatprep.subr.bf16.mxu0 0
    %591 = vmatpush1.bf16.msra.mxu0 %v550
    %592 = vmatprep.subr.bf16.mxu0 0
    %593 = vmatpush1.bf16.msra.mxu0 %v549
    %594 = vmatprep.subr.bf16.mxu0 0
    %595 = vmatpush1.bf16.msra.mxu0 %v548
    %596 = vmatprep.subr.bf16.mxu0 0
    %597 = vmatpush2.bf16.msra.mxu0 %v563
    %598 = vmatprep.subr.bf16.mxu0 0
    %599 = vmatpush2.bf16.msra.mxu0 %v562
    %600 = vmatprep.subr.bf16.mxu0 0
    %601 = vmatpush2.bf16.msra.mxu0 %v561
    %602 = vmatprep.subr.bf16.mxu0 0
    %603 = vmatpush2.bf16.msra.mxu0 %v560
    %604 = vmatprep.subr.bf16.mxu0 0
    %605 = vmatpush2.bf16.msra.mxu0 %v559
    %606 = vmatprep.subr.bf16.mxu0 0
    %607 = vmatpush2.bf16.msra.mxu0 %v558
    %608 = vmatprep.subr.bf16.mxu0 0
    %609 = vmatpush2.bf16.msra.mxu0 %v557
    %610 = vmatprep.subr.bf16.mxu0 0
    %611 = vmatpush2.bf16.msra.mxu0 %v556
    %612 = vmatprep.mubr.bf16.mxu0 %v444
    %613 = vmatmul.mubr.bf16.gmra.mxu0 %v443
    %v614 = vpop.f32.mrf.mxu0
    %v615 = vadd.f32 %v482, %v614
    %v616 = vpop.f32.mrf.mxu0
    %v617 = vpop.f32.mrf.mxu0
    %v618 = vadd.f32 %v482, %v617
    %v619 = vpop.f32.mrf.mxu0
    %620 = vdwg.mxu0
    %v621 = vtanh.pop %v615
    %v622 = vtanh.pop %v618
    %v623 = vpack.c.bf16 %v622, %v621
    %v625 = vunpack.c.l.b16 %v623
    %v626 = vunpack.c.h.b16 %v623
    %v627 = vpack.c.b16 %v625, %v625
    %v628 = vpack.c.b16 %v626, %v626
    %631 = vst [vmem:[%s7] sm:$0xf] %v627
    %632 = vst [vmem:[%s7 + $0x4] sm:$0xf] %v628
    // Predicated region
    $region42: #{actor_forward.1} parent=1 // pred_check
      _
    $region43: #{actor_forward.1} parent=1 // pred_check_branch
      %634 = sbr.rel (0) target = $region45
    $region44: #{actor_forward.1} parent=1 // pred_region
      _
    $region45: #{actor_forward.1} parent=1 // pred_fallthru
      _
    // Predicated region
    $region46: #{actor_forward.1} parent=1 // pred_check
      _
    $region47: #{actor_forward.1} parent=1 // pred_check_branch
      %636 = sbr.rel (0) target = $region49
    $region48: #{actor_forward.1} parent=1 // pred_region
      _
    $region49: #{actor_forward.1} parent=1 // pred_fallthru
      _
    %637 = vsyncpa [#allocation3], 1
    %638 = vsyncpa [#allocation5], 1

</llo_original>
